<compile_context>
chip_gen: v7x
topology: tpu7x:2x2x1
jax: 0.10.0
libtpu: 0.0.40
codegen_flags: <defaults>
</compile_context>

<pallas_src>
import jax
import jax.numpy as jnp
from jax.experimental import pallas as pl
from jax.experimental.pallas import tpu as pltpu

IN_FEATURES = 500     # fc1 input width
HIDDEN = 256          # numberHiddenUnitsD
OUT_FEATURES = 2
OUT_PAD = 128         # fc3 MXU width (N=128 fills a v5e MXU tile; fc3 is <10% of FLOPs)
EPS = 1e-5
NEG_SLOPE = 0.01


def _discriminator_kernel(x_ref, w1_ref, w2_ref, w3_ref, p_ref, out_ref):
    """x_ref: [B,500] f32; w*: bf16; p_ref: [8,256] f32 packed per-channel params.

    p_ref rows: 0=gamma1, 1=beta1, 2=gamma2, 3=beta2, 4=b3 (lanes [:2] used).
    """
    inv_b = 1.0 / x_ref.shape[0]            # static batch size

    g1 = p_ref[0:1, :]
    beta1 = p_ref[1:2, :]
    g2 = p_ref[2:3, :]
    beta2 = p_ref[3:4, :]
    b3 = p_ref[4:5, :OUT_PAD]

    def bn_lrelu(h, g, beta):
        # Training-mode BatchNorm1d, two-pass biased variance, folded affine.
        mu = jnp.sum(h, axis=0, keepdims=True) * inv_b
        c = h - mu
        var = jnp.sum(c * c, axis=0, keepdims=True) * inv_b
        h = c * (g * jax.lax.rsqrt(var + EPS)) + beta
        # LeakyReLU(0.01): single max (identical math for 0 < slope < 1).
        return jnp.maximum(h, NEG_SLOPE * h)

    # ---- fc1 (bias cancelled by bn1) + bn1 + leaky_relu ----
    x = x_ref[...].astype(jnp.bfloat16)      # cast fused into the kernel
    h = jnp.dot(x, w1_ref[...], preferred_element_type=jnp.float32)
    h = bn_lrelu(h, g1, beta1)

    # ---- fc2 (bias cancelled by bn2) + bn2 + leaky_relu ----
    h = jnp.dot(h.astype(jnp.bfloat16), w2_ref[...],
                preferred_element_type=jnp.float32)
    h = bn_lrelu(h, g2, beta2)

    # ---- fc3 (MXU runs N=128-padded; only the 2 real logits are stored) ----
    logits = jnp.dot(h.astype(jnp.bfloat16), w3_ref[...],
                     preferred_element_type=jnp.float32) + b3
    out_ref[...] = logits[:, :OUT_FEATURES].astype(out_ref.dtype)


def discriminator_forward(x, params):
    """x: [B, 500] float32. Returns [B, 2] float32 logits."""
    B = x.shape[0]
    args = (x, params["w1"], params["w2"], params["w3"], params["p"])
    vmem_spec = pl.BlockSpec(memory_space=pltpu.MemorySpace.VMEM)
    return pl.pallas_call(
        _discriminator_kernel,
        out_shape=jax.ShapeDtypeStruct((B, OUT_FEATURES), jnp.float32),
        in_specs=[vmem_spec] * len(args),
        out_specs=vmem_spec,
        compiler_params=pltpu.CompilerParams(
            vmem_limit_bytes=32 * 1024 * 1024),
    )(*args)


def init_params(key):
    """Deterministic synthetic parameters matching the module's shapes,
    stored in the layout/dtypes the kernel consumes."""
    ks = jax.random.split(key, 5)

    def linear_w(kw, fan_in, fan_out):
        # PyTorch Linear default: U(-1/sqrt(fan_in), 1/sqrt(fan_in))
        bound = 1.0 / jnp.sqrt(jnp.float32(fan_in))
        return jax.random.uniform(kw, (fan_in, fan_out), jnp.float32, -bound, bound)

    w1 = linear_w(ks[0], IN_FEATURES, HIDDEN)   # fc1 bias cancelled by bn1
    w2 = linear_w(ks[1], HIDDEN, HIDDEN)        # fc2 bias cancelled by bn2
    w3 = linear_w(ks[2], HIDDEN, OUT_FEATURES)
    b_bound = 1.0 / jnp.sqrt(jnp.float32(HIDDEN))
    b3 = jax.random.uniform(ks[3], (OUT_FEATURES,), jnp.float32, -b_bound, b_bound)

    # Non-trivial BN affine params so the test exercises the gamma/beta path
    # (PyTorch default init would be gamma=1, beta=0).
    kg1, kb1, kg2, kb2 = jax.random.split(ks[4], 4)
    g1 = 1.0 + 0.1 * jax.random.normal(kg1, (HIDDEN,), jnp.float32)
    beta1 = 0.1 * jax.random.normal(kb1, (HIDDEN,), jnp.float32)
    g2 = 1.0 + 0.1 * jax.random.normal(kg2, (HIDDEN,), jnp.float32)
    beta2 = 0.1 * jax.random.normal(kb2, (HIDDEN,), jnp.float32)

    # fc3 output padded 2 -> 128 with zero columns (MXU width).
    w3p = jnp.pad(w3, ((0, 0), (0, OUT_PAD - OUT_FEATURES)))

    # Pack the five per-channel vectors into a single [8, 256] f32 array.
    packed = jnp.zeros((8, HIDDEN), jnp.float32)
    packed = packed.at[0].set(g1).at[1].set(beta1).at[2].set(g2).at[3].set(beta2)
    packed = packed.at[4, :OUT_FEATURES].set(b3)

    return dict(
        w1=w1.astype(jnp.bfloat16),
        w2=w2.astype(jnp.bfloat16),
        w3=w3p.astype(jnp.bfloat16),
        p=packed,
    )


def _reference_forward(x, p):
    """Pure-JAX reference mirroring the kernel's bf16 matmul-input precision
    (intentional trade-off; BN and accumulation are f32)."""
    pp = p["p"]
    g1, beta1 = pp[0:1, :], pp[1:2, :]
    g2, beta2 = pp[2:3, :], pp[3:4, :]
    b3 = pp[4:5, :OUT_PAD]

    def bn(h, g, b):
        mu = jnp.mean(h, axis=0, keepdims=True)
        var = jnp.mean((h - mu) ** 2, axis=0, keepdims=True)   # biased
        return (h - mu) / jnp.sqrt(var + EPS) * g + b

    def lrelu(h):
        return jnp.where(h > 0, h, NEG_SLOPE * h)

    h = lrelu(bn(jnp.dot(x.astype(jnp.bfloat16), p["w1"],
                         preferred_element_type=jnp.float32), g1, beta1))
    h = lrelu(bn(jnp.dot(h.astype(jnp.bfloat16), p["w2"],
                         preferred_element_type=jnp.float32), g2, beta2))
    out = jnp.dot(h.astype(jnp.bfloat16), p["w3"],
                  preferred_element_type=jnp.float32) + b3
    return out[:, :OUT_FEATURES]


if __name__ == "__main__":
    key = jax.random.PRNGKey(0)
    kx, kp = jax.random.split(key)

    B = 8
    x = jax.random.normal(kx, (B, IN_FEATURES), jnp.float32)
    params = init_params(kp)

    out = discriminator_forward(x, params)
    out = jax.block_until_ready(out)

    ref = _reference_forward(x, params)
    assert out.shape == (B, OUT_FEATURES)
    assert jnp.allclose(out, ref, atol=2e-3, rtol=2e-3), "mismatch vs reference"

    print("KERNEL_OK")
</pallas_src>

<mosaic_0001>
module attributes {stable_mosaic.version = 11 : i64} {
  func.func @_discriminator_kernel(%arg0: memref<8x500xf32, #tpu.memory_space<vmem>>, %arg1: memref<500x256xbf16, #tpu.memory_space<vmem>>, %arg2: memref<256x256xbf16, #tpu.memory_space<vmem>>, %arg3: memref<256x128xbf16, #tpu.memory_space<vmem>>, %arg4: memref<8x256xf32, #tpu.memory_space<vmem>>, %arg5: memref<8x2xf32, #tpu.memory_space<vmem>>) attributes {dimension_semantics = [], scalar_prefetch = 0 : i64, scratch_operands = 0 : i64, tpu.core_type = #tpu.core_type<tc>} {
    %c0 = arith.constant 0 : index
    %c0_0 = arith.constant 0 : index
    %0 = vector.load %arg4[%c0, %c0_0] : memref<8x256xf32, #tpu.memory_space<vmem>>, vector<1x256xf32>
    %c1 = arith.constant 1 : index
    %c0_1 = arith.constant 0 : index
    %1 = vector.load %arg4[%c1, %c0_1] : memref<8x256xf32, #tpu.memory_space<vmem>>, vector<1x256xf32>
    %c2 = arith.constant 2 : index
    %c0_2 = arith.constant 0 : index
    %2 = vector.load %arg4[%c2, %c0_2] : memref<8x256xf32, #tpu.memory_space<vmem>>, vector<1x256xf32>
    %c3 = arith.constant 3 : index
    %c0_3 = arith.constant 0 : index
    %3 = vector.load %arg4[%c3, %c0_3] : memref<8x256xf32, #tpu.memory_space<vmem>>, vector<1x256xf32>
    %c4 = arith.constant 4 : index
    %c0_4 = arith.constant 0 : index
    %4 = vector.load %arg4[%c4, %c0_4] : memref<8x256xf32, #tpu.memory_space<vmem>>, vector<1x128xf32>
    %c0_5 = arith.constant 0 : index
    %c0_6 = arith.constant 0 : index
    %5 = vector.load %arg0[%c0_5, %c0_6] : memref<8x500xf32, #tpu.memory_space<vmem>>, vector<8x500xf32>
    %6 = arith.truncf %5 : vector<8x500xf32> to vector<8x500xbf16>
    %c0_7 = arith.constant 0 : index
    %c0_8 = arith.constant 0 : index
    %7 = vector.load %arg1[%c0_7, %c0_8] : memref<500x256xbf16, #tpu.memory_space<vmem>>, vector<500x256xbf16>
    %cst = arith.constant dense<0.000000e+00> : vector<8x256xf32>
    %8 = tpu.matmul %6, %7, %cst {dimension_numbers = #tpu.dot_dimension_numbers<[1], [0], [0], [1], [0, 0, 1, 1], [], []>} : vector<8x500xbf16>, vector<500x256xbf16>, vector<8x256xf32> -> vector<8x256xf32>
    %cst_9 = arith.constant dense<0.000000e+00> : vector<256xf32>
    %9 = vector.multi_reduction <add>, %8, %cst_9 [0] : vector<8x256xf32> to vector<256xf32>
    %10 = vector.shape_cast %9 : vector<256xf32> to vector<1x256xf32>
    %cst_10 = arith.constant 1.250000e-01 : f32
    %11 = vector.broadcast %cst_10 : f32 to vector<1x256xf32>
    %12 = arith.mulf %10, %11 : vector<1x256xf32>
    %13 = vector.broadcast %12 : vector<1x256xf32> to vector<8x256xf32>
    %14 = arith.subf %8, %13 : vector<8x256xf32>
    %15 = arith.mulf %14, %14 : vector<8x256xf32>
    %cst_11 = arith.constant dense<0.000000e+00> : vector<256xf32>
    %16 = vector.multi_reduction <add>, %15, %cst_11 [0] : vector<8x256xf32> to vector<256xf32>
    %17 = vector.shape_cast %16 : vector<256xf32> to vector<1x256xf32>
    %cst_12 = arith.constant 1.250000e-01 : f32
    %18 = vector.broadcast %cst_12 : f32 to vector<1x256xf32>
    %19 = arith.mulf %17, %18 : vector<1x256xf32>
    %cst_13 = arith.constant 9.99999974E-6 : f32
    %20 = vector.broadcast %cst_13 : f32 to vector<1x256xf32>
    %21 = arith.addf %19, %20 : vector<1x256xf32>
    %22 = math.rsqrt %21 : vector<1x256xf32>
    %23 = arith.mulf %0, %22 : vector<1x256xf32>
    %24 = vector.broadcast %23 : vector<1x256xf32> to vector<8x256xf32>
    %25 = arith.mulf %14, %24 : vector<8x256xf32>
    %26 = vector.broadcast %1 : vector<1x256xf32> to vector<8x256xf32>
    %27 = arith.addf %25, %26 : vector<8x256xf32>
    %cst_14 = arith.constant 0.00999999977 : f32
    %28 = vector.broadcast %cst_14 : f32 to vector<8x256xf32>
    %29 = arith.mulf %28, %27 : vector<8x256xf32>
    %30 = arith.maximumf %27, %29 : vector<8x256xf32>
    %31 = arith.truncf %30 : vector<8x256xf32> to vector<8x256xbf16>
    %c0_15 = arith.constant 0 : index
    %c0_16 = arith.constant 0 : index
    %32 = vector.load %arg2[%c0_15, %c0_16] : memref<256x256xbf16, #tpu.memory_space<vmem>>, vector<256x256xbf16>
    %cst_17 = arith.constant dense<0.000000e+00> : vector<8x256xf32>
    %33 = tpu.matmul %31, %32, %cst_17 {dimension_numbers = #tpu.dot_dimension_numbers<[1], [0], [0], [1], [0, 0, 1, 1], [], []>} : vector<8x256xbf16>, vector<256x256xbf16>, vector<8x256xf32> -> vector<8x256xf32>
    %cst_18 = arith.constant dense<0.000000e+00> : vector<256xf32>
    %34 = vector.multi_reduction <add>, %33, %cst_18 [0] : vector<8x256xf32> to vector<256xf32>
    %35 = vector.shape_cast %34 : vector<256xf32> to vector<1x256xf32>
    %cst_19 = arith.constant 1.250000e-01 : f32
    %36 = vector.broadcast %cst_19 : f32 to vector<1x256xf32>
    %37 = arith.mulf %35, %36 : vector<1x256xf32>
    %38 = vector.broadcast %37 : vector<1x256xf32> to vector<8x256xf32>
    %39 = arith.subf %33, %38 : vector<8x256xf32>
    %40 = arith.mulf %39, %39 : vector<8x256xf32>
    %cst_20 = arith.constant dense<0.000000e+00> : vector<256xf32>
    %41 = vector.multi_reduction <add>, %40, %cst_20 [0] : vector<8x256xf32> to vector<256xf32>
    %42 = vector.shape_cast %41 : vector<256xf32> to vector<1x256xf32>
    %cst_21 = arith.constant 1.250000e-01 : f32
    %43 = vector.broadcast %cst_21 : f32 to vector<1x256xf32>
    %44 = arith.mulf %42, %43 : vector<1x256xf32>
    %cst_22 = arith.constant 9.99999974E-6 : f32
    %45 = vector.broadcast %cst_22 : f32 to vector<1x256xf32>
    %46 = arith.addf %44, %45 : vector<1x256xf32>
    %47 = math.rsqrt %46 : vector<1x256xf32>
    %48 = arith.mulf %2, %47 : vector<1x256xf32>
    %49 = vector.broadcast %48 : vector<1x256xf32> to vector<8x256xf32>
    %50 = arith.mulf %39, %49 : vector<8x256xf32>
    %51 = vector.broadcast %3 : vector<1x256xf32> to vector<8x256xf32>
    %52 = arith.addf %50, %51 : vector<8x256xf32>
    %cst_23 = arith.constant 0.00999999977 : f32
    %53 = vector.broadcast %cst_23 : f32 to vector<8x256xf32>
    %54 = arith.mulf %53, %52 : vector<8x256xf32>
    %55 = arith.maximumf %52, %54 : vector<8x256xf32>
    %56 = arith.truncf %55 : vector<8x256xf32> to vector<8x256xbf16>
    %c0_24 = arith.constant 0 : index
    %c0_25 = arith.constant 0 : index
    %57 = vector.load %arg3[%c0_24, %c0_25] : memref<256x128xbf16, #tpu.memory_space<vmem>>, vector<256x128xbf16>
    %cst_26 = arith.constant dense<0.000000e+00> : vector<8x128xf32>
    %58 = tpu.matmul %56, %57, %cst_26 {dimension_numbers = #tpu.dot_dimension_numbers<[1], [0], [0], [1], [0, 0, 1, 1], [], []>} : vector<8x256xbf16>, vector<256x128xbf16>, vector<8x128xf32> -> vector<8x128xf32>
    %59 = vector.broadcast %4 : vector<1x128xf32> to vector<8x128xf32>
    %60 = arith.addf %58, %59 : vector<8x128xf32>
    %61 = vector.extract_strided_slice %60 {offsets = [0, 0], sizes = [8, 2], strides = [1, 1]} : vector<8x128xf32> to vector<8x2xf32>
    %c0_27 = arith.constant 0 : index
    %c0_28 = arith.constant 0 : index
    %62 = vector.load %arg5[%c0_27, %c0_28] : memref<8x2xf32, #tpu.memory_space<vmem>>, vector<8x2xf32>
    tpu.vector_store %arg5[%c0_27, %c0_28], %61 {strides = array<i32>} : memref<8x2xf32, #tpu.memory_space<vmem>>, vector<8x2xf32>,
    return
  }
}

</mosaic_0001>

<llo_original>
// kernel: tpu_custom_call.1
$region0: #{tpu_custom_call.1}
  #allocation0 [shape = 'u32[]', space=smem, size = 0x4, offset = 0x4, fixed_abs, tag = 'smem constant byte address 0x4 - core index']
  #allocation1 [shape = 'u32[144,128]{1,0:T(1,128)}', space=vmem, size = 0x12000, scoped, tag = 'internal scratch']
  %s0 = inlined_call_operand.hbm [shape: f32[8,500], index: 0, kind: input, shape index: {}]
  %s1 = inlined_call_operand.hbm [shape: bf16[500,256], index: 1, kind: input, shape index: {}]
  %s2 = inlined_call_operand.hbm [shape: bf16[256,256], index: 2, kind: input, shape index: {}]
  %s3 = inlined_call_operand.hbm [shape: bf16[256,128], index: 3, kind: input, shape index: {}]
  %s4 = inlined_call_operand.hbm [shape: f32[8,256], index: 4, kind: input, shape index: {}]
  %s5 = inlined_call_operand.vmem [shape: f32[8,2], index: 5, kind: output, shape index: {}]
  %s6 = sld [smem:[#allocation0]]
  $region50: #{tpu_custom_call.1} parent=0
    _
  %s8 = ssub.s32 1, %s6
  %s9 = scalar_select 0, %s8, %s6
  $region1: #{tpu_custom_call.1} parent=0
    #allocation2 [shape = 'u8[16384]{0}', space=vmem, size = 0x4000, scoped, tag = 'input window, operand 0, single buffered']
    #allocation3 [shape = 's32[1]{0}', space=sflag, size = 0x4, scoped, tag = 'scoped memory for tpu_custom_call.1']
    #allocation4 [shape = 'u8[258048]{0}', space=vmem, size = 0x3f000, scoped, tag = 'input window, operand 1, single buffered']
    #allocation5 [shape = 's32[1]{0}', space=sflag, size = 0x4, scoped, tag = 'scoped memory for tpu_custom_call.1']
    #allocation6 [shape = 'u8[131072]{0}', space=vmem, size = 0x20000, scoped, tag = 'input window, operand 2, single buffered']
    #allocation7 [shape = 'u8[65536]{0}', space=vmem, size = 0x10000, scoped, tag = 'input window, operand 3, single buffered']
    #allocation8 [shape = 's32[1]{0}', space=sflag, size = 0x4, scoped, tag = 'scoped memory for tpu_custom_call.1']
    #allocation9 [shape = 'u8[8192]{0}', space=vmem, size = 0x2000, scoped, tag = 'input window, operand 4, single buffered']
    %10 = vsyncpa [#allocation3], 0
    %11 = vsyncpa [#allocation5], 0
    %12 = vsyncpa [#allocation8], 0
    // Predicated region
    $region2: #{tpu_custom_call.1} parent=1 // pred_check
      _
    $region3: #{tpu_custom_call.1} parent=1 // pred_check_branch
      %14 = sbr.rel (0) target = $region5
    $region4: #{tpu_custom_call.1} parent=1 // pred_region
      %s16 = ssub.s32 512, 512
      %17 = vsyncadd [#allocation3], %s16
      %s19 = sshll.u32 [#allocation2], 4
      %s20 = int_to_ptr.vmem [resolvable:$true] %s19
      %22 = dma.hbm_to_vmem [thread:$0]  %s0, 512, %s20, [#allocation3]
    $region5: #{tpu_custom_call.1} parent=1 // pred_fallthru
      _
    // Predicated region
    $region6: #{tpu_custom_call.1} parent=1 // pred_check
      _
    $region7: #{tpu_custom_call.1} parent=1 // pred_check_branch
      %24 = sbr.rel (0) target = $region9
    $region8: #{tpu_custom_call.1} parent=1 // pred_region
      %s26 = ssub.s32 8064, 8064
      %27 = vsyncadd [#allocation5], %s26
      %s28 = sshll.u32 [#allocation4], 4
      %s29 = int_to_ptr.vmem [resolvable:$true] %s28
      %34 = dma.hbm_to_vmem [thread:$0]  %s1, 8064, %s29, [#allocation5], 128, 128, 8
    $region9: #{tpu_custom_call.1} parent=1 // pred_fallthru
      _
    // Predicated region
    $region10: #{tpu_custom_call.1} parent=1 // pred_check
      _
    $region11: #{tpu_custom_call.1} parent=1 // pred_check_branch
      %36 = sbr.rel (0) target = $region13
    $region12: #{tpu_custom_call.1} parent=1 // pred_region
      %s38 = ssub.s32 4096, 4096
      %39 = vsyncadd [#allocation5], %s38
      %s40 = sshll.u32 [#allocation6], 4
      %s41 = int_to_ptr.vmem [resolvable:$true] %s40
      %46 = dma.hbm_to_vmem [thread:$0]  %s2, 4096, %s41, [#allocation5], 128, 128, 8
    $region13: #{tpu_custom_call.1} parent=1 // pred_fallthru
      _
    // Predicated region
    $region14: #{tpu_custom_call.1} parent=1 // pred_check
      _
    $region15: #{tpu_custom_call.1} parent=1 // pred_check_branch
      %48 = sbr.rel (0) target = $region17
    $region16: #{tpu_custom_call.1} parent=1 // pred_region
      %s50 = ssub.s32 2048, 2048
      %51 = vsyncadd [#allocation8], %s50
      %s52 = sshll.u32 [#allocation7], 4
      %s53 = int_to_ptr.vmem [resolvable:$true] %s52
      %58 = dma.hbm_to_vmem [thread:$0]  %s3, 2048, %s53, [#allocation8], 64, 64, 4
    $region17: #{tpu_custom_call.1} parent=1 // pred_fallthru
      _
    // Predicated region
    $region18: #{tpu_custom_call.1} parent=1 // pred_check
      _
    $region19: #{tpu_custom_call.1} parent=1 // pred_check_branch
      %60 = sbr.rel (0) target = $region21
    $region20: #{tpu_custom_call.1} parent=1 // pred_region
      %s62 = ssub.s32 256, 256
      %63 = vsyncadd [#allocation8], %s62
      %s65 = sshll.u32 [#allocation9], 4
      %s66 = int_to_ptr.vmem [resolvable:$true] %s65
      %68 = dma.hbm_to_vmem [thread:$0]  %s4, 256, %s66, [#allocation8]
    $region21: #{tpu_custom_call.1} parent=1 // pred_fallthru
      _
    // Predicated region
    $region22: #{tpu_custom_call.1} parent=1 // pred_check
      _
    $region23: #{tpu_custom_call.1} parent=1 // pred_check_branch
      %70 = sbr.rel (0) target = $region25
    $region24: #{tpu_custom_call.1} parent=1 // pred_region
      %71 = dma.done [#allocation3], 512
    $region25: #{tpu_custom_call.1} parent=1 // pred_fallthru
      _
    // Predicated region
    $region26: #{tpu_custom_call.1} parent=1 // pred_check
      _
    $region27: #{tpu_custom_call.1} parent=1 // pred_check_branch
      %73 = sbr.rel (0) target = $region29
    $region28: #{tpu_custom_call.1} parent=1 // pred_region
      %74 = dma.done [#allocation5], 8064
    $region29: #{tpu_custom_call.1} parent=1 // pred_fallthru
      _
    // Predicated region
    $region30: #{tpu_custom_call.1} parent=1 // pred_check
      _
    $region31: #{tpu_custom_call.1} parent=1 // pred_check_branch
      %76 = sbr.rel (0) target = $region33
    $region32: #{tpu_custom_call.1} parent=1 // pred_region
      %77 = dma.done [#allocation5], 4096
    $region33: #{tpu_custom_call.1} parent=1 // pred_fallthru
      _
    // Predicated region
    $region34: #{tpu_custom_call.1} parent=1 // pred_check
      _
    $region35: #{tpu_custom_call.1} parent=1 // pred_check_branch
      %79 = sbr.rel (0) target = $region37
    $region36: #{tpu_custom_call.1} parent=1 // pred_region
      %80 = dma.done [#allocation8], 2048
    $region37: #{tpu_custom_call.1} parent=1 // pred_fallthru
      _
    // Predicated region
    $region38: #{tpu_custom_call.1} parent=1 // pred_check
      _
    $region39: #{tpu_custom_call.1} parent=1 // pred_check_branch
      %82 = sbr.rel (0) target = $region41
    $region40: #{tpu_custom_call.1} parent=1 // pred_region
      %83 = dma.done [#allocation8], 256
    $region41: #{tpu_custom_call.1} parent=1 // pred_fallthru
      _
    %v85 = vld [vmem:[#allocation9] ss:$8 sm:$0x3]
    %s86 = scalar_lea.vmem [#allocation9], 1
    %v87 = vld [vmem:[%s86] ss:$8 sm:$0x3]
    %s88 = scalar_lea.vmem [#allocation9], 2
    %v89 = vld [vmem:[%s88] ss:$8 sm:$0x3]
    %s90 = scalar_lea.vmem [#allocation9], 3
    %v91 = vld [vmem:[%s90] ss:$8 sm:$0x3]
    %v92 = vld [vmem:[#allocation9 + $0x4] ss:$0 sm:$0xff]
    %v93 = vld [vmem:[#allocation2] sm:$0xff]
    %v94 = vld [vmem:[#allocation2 + $0x8] sm:$0xff]
    %v95 = vld [vmem:[#allocation2 + $0x10] sm:$0xff]
    %v96 = vld [vmem:[#allocation2 + $0x18] sm:$0xff]
    %v97 = vpack.c.bf16 %v93, %v93
    %v98 = vpack.c.bf16 %v94, %v94
    %v99 = vpack.c.bf16 %v95, %v95
    %v100 = vpack.c.bf16 %v96, %v96
    %v101 = vld [vmem:[#allocation4] sm:$0xff]
    %v102 = vld [vmem:[#allocation4 + $0x8] sm:$0xff]
    %v103 = vld [vmem:[#allocation4 + $0x10] sm:$0xff]
    %v104 = vld [vmem:[#allocation4 + $0x18] sm:$0xff]
    %v105 = vld [vmem:[#allocation4 + $0x20] sm:$0xff]
    %v106 = vld [vmem:[#allocation4 + $0x28] sm:$0xff]
    %v107 = vld [vmem:[#allocation4 + $0x30] sm:$0xff]
    %v108 = vld [vmem:[#allocation4 + $0x38] sm:$0xff]
    %v109 = vld [vmem:[#allocation4 + $0x40] sm:$0xff]
    %v110 = vld [vmem:[#allocation4 + $0x48] sm:$0xff]
    %v111 = vld [vmem:[#allocation4 + $0x50] sm:$0xff]
    %v112 = vld [vmem:[#allocation4 + $0x58] sm:$0xff]
    %v113 = vld [vmem:[#allocation4 + $0x60] sm:$0xff]
    %v114 = vld [vmem:[#allocation4 + $0x68] sm:$0xff]
    %v115 = vld [vmem:[#allocation4 + $0x70] sm:$0xff]
    %v116 = vld [vmem:[#allocation4 + $0x78] sm:$0xff]
    %v117 = vld [vmem:[#allocation4 + $0x80] sm:$0xff]
    %v118 = vld [vmem:[#allocation4 + $0x88] sm:$0xff]
    %v119 = vld [vmem:[#allocation4 + $0x90] sm:$0xff]
    %v120 = vld [vmem:[#allocation4 + $0x98] sm:$0xff]
    %v121 = vld [vmem:[#allocation4 + $0xa0] sm:$0xff]
    %v122 = vld [vmem:[#allocation4 + $0xa8] sm:$0xff]
    %v123 = vld [vmem:[#allocation4 + $0xb0] sm:$0xff]
    %v124 = vld [vmem:[#allocation4 + $0xb8] sm:$0xff]
    %v125 = vld [vmem:[#allocation4 + $0xc0] sm:$0xff]
    %v126 = vld [vmem:[#allocation4 + $0xc8] sm:$0xff]
    %v127 = vld [vmem:[#allocation4 + $0xd0] sm:$0xff]
    %v128 = vld [vmem:[#allocation4 + $0xd8] sm:$0xff]
    %v129 = vld [vmem:[#allocation4 + $0xe0] sm:$0xff]
    %v130 = vld [vmem:[#allocation4 + $0xe8] sm:$0xff]
    %v131 = vld [vmem:[#allocation4 + $0xf0] sm:$0xff]
    %v132 = vld [vmem:[#allocation4 + $0xf8] sm:$0xff]
    %v133 = vld [vmem:[#allocation4 + $0x100] sm:$0xff]
    %v134 = vld [vmem:[#allocation4 + $0x108] sm:$0xff]
    %v135 = vld [vmem:[#allocation4 + $0x110] sm:$0xff]
    %v136 = vld [vmem:[#allocation4 + $0x118] sm:$0xff]
    %v137 = vld [vmem:[#allocation4 + $0x120] sm:$0xff]
    %v138 = vld [vmem:[#allocation4 + $0x128] sm:$0xff]
    %v139 = vld [vmem:[#allocation4 + $0x130] sm:$0xff]
    %v140 = vld [vmem:[#allocation4 + $0x138] sm:$0xff]
    %v141 = vld [vmem:[#allocation4 + $0x140] sm:$0xff]
    %v142 = vld [vmem:[#allocation4 + $0x148] sm:$0xff]
    %v143 = vld [vmem:[#allocation4 + $0x150] sm:$0xff]
    %v144 = vld [vmem:[#allocation4 + $0x158] sm:$0xff]
    %v145 = vld [vmem:[#allocation4 + $0x160] sm:$0xff]
    %v146 = vld [vmem:[#allocation4 + $0x168] sm:$0xff]
    %v147 = vld [vmem:[#allocation4 + $0x170] sm:$0xff]
    %v148 = vld [vmem:[#allocation4 + $0x178] sm:$0xff]
    %v149 = vld [vmem:[#allocation4 + $0x180] sm:$0xff]
    %v150 = vld [vmem:[#allocation4 + $0x188] sm:$0xff]
    %v151 = vld [vmem:[#allocation4 + $0x190] sm:$0xff]
    %v152 = vld [vmem:[#allocation4 + $0x198] sm:$0xff]
    %v153 = vld [vmem:[#allocation4 + $0x1a0] sm:$0xff]
    %v154 = vld [vmem:[#allocation4 + $0x1a8] sm:$0xff]
    %v155 = vld [vmem:[#allocation4 + $0x1b0] sm:$0xff]
    %v156 = vld [vmem:[#allocation4 + $0x1b8] sm:$0xff]
    %v157 = vld [vmem:[#allocation4 + $0x1c0] sm:$0xff]
    %v158 = vld [vmem:[#allocation4 + $0x1c8] sm:$0xff]
    %v159 = vld [vmem:[#allocation4 + $0x1d0] sm:$0xff]
    %v160 = vld [vmem:[#allocation4 + $0x1d8] sm:$0xff]
    %v161 = vld [vmem:[#allocation4 + $0x1e0] sm:$0xff]
    %v162 = vld [vmem:[#allocation4 + $0x1e8] sm:$0xff]
    %v163 = vld [vmem:[#allocation4 + $0x1f0] sm:$0x33]
    %v227 = vunpack.c.l.b16 %v101
    %v228 = vunpack.c.h.b16 %v101
    %v229 = vunpack.c.l.b16 %v102
    %v230 = vunpack.c.h.b16 %v102
    %v231 = vunpack.c.l.b16 %v103
    %v232 = vunpack.c.h.b16 %v103
    %v233 = vunpack.c.l.b16 %v104
    %v234 = vunpack.c.h.b16 %v104
    %v235 = vunpack.c.l.b16 %v105
    %v236 = vunpack.c.h.b16 %v105
    %v237 = vunpack.c.l.b16 %v106
    %v238 = vunpack.c.h.b16 %v106
    %v239 = vunpack.c.l.b16 %v107
    %v240 = vunpack.c.h.b16 %v107
    %v241 = vunpack.c.l.b16 %v108
    %v242 = vunpack.c.h.b16 %v108
    %v243 = vunpack.c.l.b16 %v109
    %v244 = vunpack.c.h.b16 %v109
    %v245 = vunpack.c.l.b16 %v110
    %v246 = vunpack.c.h.b16 %v110
    %v247 = vunpack.c.l.b16 %v111
    %v248 = vunpack.c.h.b16 %v111
    %v249 = vunpack.c.l.b16 %v112
    %v250 = vunpack.c.h.b16 %v112
    %v251 = vunpack.c.l.b16 %v113
    %v252 = vunpack.c.h.b16 %v113
    %v253 = vunpack.c.l.b16 %v114
    %v254 = vunpack.c.h.b16 %v114
    %v255 = vunpack.c.l.b16 %v115
    %v256 = vunpack.c.h.b16 %v115
    %v257 = vunpack.c.l.b16 %v116
    %v258 = vunpack.c.h.b16 %v116
    %v259 = vunpack.c.l.b16 %v117
    %v260 = vunpack.c.h.b16 %v117
    %v261 = vunpack.c.l.b16 %v118
    %v262 = vunpack.c.h.b16 %v118
    %v263 = vunpack.c.l.b16 %v119
    %v264 = vunpack.c.h.b16 %v119
    %v265 = vunpack.c.l.b16 %v120
    %v266 = vunpack.c.h.b16 %v120
    %v267 = vunpack.c.l.b16 %v121
    %v268 = vunpack.c.h.b16 %v121
    %v269 = vunpack.c.l.b16 %v122
    %v270 = vunpack.c.h.b16 %v122
    %v271 = vunpack.c.l.b16 %v123
    %v272 = vunpack.c.h.b16 %v123
    %v273 = vunpack.c.l.b16 %v124
    %v274 = vunpack.c.h.b16 %v124
    %v275 = vunpack.c.l.b16 %v125
    %v276 = vunpack.c.h.b16 %v125
    %v277 = vunpack.c.l.b16 %v126
    %v278 = vunpack.c.h.b16 %v126
    %v279 = vunpack.c.l.b16 %v127
    %v280 = vunpack.c.h.b16 %v127
    %v281 = vunpack.c.l.b16 %v128
    %v282 = vunpack.c.h.b16 %v128
    %v283 = vunpack.c.l.b16 %v129
    %v284 = vunpack.c.h.b16 %v129
    %v285 = vunpack.c.l.b16 %v130
    %v286 = vunpack.c.h.b16 %v130
    %v287 = vunpack.c.l.b16 %v131
    %v288 = vunpack.c.h.b16 %v131
    %v289 = vunpack.c.l.b16 %v132
    %v290 = vunpack.c.h.b16 %v132
    %v291 = vunpack.c.l.b16 %v133
    %v292 = vunpack.c.h.b16 %v133
    %v293 = vunpack.c.l.b16 %v134
    %v294 = vunpack.c.h.b16 %v134
    %v295 = vunpack.c.l.b16 %v135
    %v296 = vunpack.c.h.b16 %v135
    %v297 = vunpack.c.l.b16 %v136
    %v298 = vunpack.c.h.b16 %v136
    %v299 = vunpack.c.l.b16 %v137
    %v300 = vunpack.c.h.b16 %v137
    %v301 = vunpack.c.l.b16 %v138
    %v302 = vunpack.c.h.b16 %v138
    %v303 = vunpack.c.l.b16 %v139
    %v304 = vunpack.c.h.b16 %v139
    %v305 = vunpack.c.l.b16 %v140
    %v306 = vunpack.c.h.b16 %v140
    %v307 = vunpack.c.l.b16 %v141
    %v308 = vunpack.c.h.b16 %v141
    %v309 = vunpack.c.l.b16 %v142
    %v310 = vunpack.c.h.b16 %v142
    %v311 = vunpack.c.l.b16 %v143
    %v312 = vunpack.c.h.b16 %v143
    %v313 = vunpack.c.l.b16 %v144
    %v314 = vunpack.c.h.b16 %v144
    %v315 = vunpack.c.l.b16 %v145
    %v316 = vunpack.c.h.b16 %v145
    %v317 = vunpack.c.l.b16 %v146
    %v318 = vunpack.c.h.b16 %v146
    %v319 = vunpack.c.l.b16 %v147
    %v320 = vunpack.c.h.b16 %v147
    %v321 = vunpack.c.l.b16 %v148
    %v322 = vunpack.c.h.b16 %v148
    %v323 = vunpack.c.l.b16 %v149
    %v324 = vunpack.c.h.b16 %v149
    %v325 = vunpack.c.l.b16 %v150
    %v326 = vunpack.c.h.b16 %v150
    %v327 = vunpack.c.l.b16 %v151
    %v328 = vunpack.c.h.b16 %v151
    %v329 = vunpack.c.l.b16 %v152
    %v330 = vunpack.c.h.b16 %v152
    %v331 = vunpack.c.l.b16 %v153
    %v332 = vunpack.c.h.b16 %v153
    %v333 = vunpack.c.l.b16 %v154
    %v334 = vunpack.c.h.b16 %v154
    %v335 = vunpack.c.l.b16 %v155
    %v336 = vunpack.c.h.b16 %v155
    %v337 = vunpack.c.l.b16 %v156
    %v338 = vunpack.c.h.b16 %v156
    %v339 = vunpack.c.l.b16 %v157
    %v340 = vunpack.c.h.b16 %v157
    %v341 = vunpack.c.l.b16 %v158
    %v342 = vunpack.c.h.b16 %v158
    %v343 = vunpack.c.l.b16 %v159
    %v344 = vunpack.c.h.b16 %v159
    %v345 = vunpack.c.l.b16 %v160
    %v346 = vunpack.c.h.b16 %v160
    %v347 = vunpack.c.l.b16 %v161
    %v348 = vunpack.c.h.b16 %v161
    %v349 = vunpack.c.l.b16 %v162
    %v350 = vunpack.c.h.b16 %v162
    %v351 = vunpack.c.l.b16 %v163
    %v352 = vunpack.c.h.b16 %v163
    %v353 = vpack.c.b16 %v229, %v227
    %v354 = vpack.c.b16 %v230, %v228
    %v355 = vpack.c.b16 %v233, %v231
    %v356 = vpack.c.b16 %v234, %v232
    %v357 = vpack.c.b16 %v237, %v235
    %v358 = vpack.c.b16 %v238, %v236
    %v359 = vpack.c.b16 %v241, %v239
    %v360 = vpack.c.b16 %v242, %v240
    %v361 = vpack.c.b16 %v245, %v243
    %v362 = vpack.c.b16 %v246, %v244
    %v363 = vpack.c.b16 %v249, %v247
    %v364 = vpack.c.b16 %v250, %v248
    %v365 = vpack.c.b16 %v253, %v251
    %v366 = vpack.c.b16 %v254, %v252
    %v367 = vpack.c.b16 %v257, %v255
    %v368 = vpack.c.b16 %v258, %v256
    %v369 = vpack.c.b16 %v261, %v259
    %v370 = vpack.c.b16 %v262, %v260
    %v371 = vpack.c.b16 %v265, %v263
    %v372 = vpack.c.b16 %v266, %v264
    %v373 = vpack.c.b16 %v269, %v267
    %v374 = vpack.c.b16 %v270, %v268
    %v375 = vpack.c.b16 %v273, %v271
    %v376 = vpack.c.b16 %v274, %v272
    %v377 = vpack.c.b16 %v277, %v275
    %v378 = vpack.c.b16 %v278, %v276
    %v379 = vpack.c.b16 %v281, %v279
    %v380 = vpack.c.b16 %v282, %v280
    %v381 = vpack.c.b16 %v285, %v283
    %v382 = vpack.c.b16 %v286, %v284
    %v383 = vpack.c.b16 %v289, %v287
    %v384 = vpack.c.b16 %v290, %v288
    %v385 = vpack.c.b16 %v293, %v291
    %v386 = vpack.c.b16 %v294, %v292
    %v387 = vpack.c.b16 %v297, %v295
    %v388 = vpack.c.b16 %v298, %v296
    %v389 = vpack.c.b16 %v301, %v299
    %v390 = vpack.c.b16 %v302, %v300
    %v391 = vpack.c.b16 %v305, %v303
    %v392 = vpack.c.b16 %v306, %v304
    %v393 = vpack.c.b16 %v309, %v307
    %v394 = vpack.c.b16 %v310, %v308
    %v395 = vpack.c.b16 %v313, %v311
    %v396 = vpack.c.b16 %v314, %v312
    %v397 = vpack.c.b16 %v317, %v315
    %v398 = vpack.c.b16 %v318, %v316
    %v399 = vpack.c.b16 %v321, %v319
    %v400 = vpack.c.b16 %v322, %v320
    %v401 = vpack.c.b16 %v325, %v323
    %v402 = vpack.c.b16 %v326, %v324
    %v403 = vpack.c.b16 %v329, %v327
    %v404 = vpack.c.b16 %v330, %v328
    %v405 = vpack.c.b16 %v333, %v331
    %v406 = vpack.c.b16 %v334, %v332
    %v407 = vpack.c.b16 %v337, %v335
    %v408 = vpack.c.b16 %v338, %v336
    %v409 = vpack.c.b16 %v341, %v339
    %v410 = vpack.c.b16 %v342, %v340
    %v411 = vpack.c.b16 %v345, %v343
    %v412 = vpack.c.b16 %v346, %v344
    %v413 = vpack.c.b16 %v349, %v347
    %v414 = vpack.c.b16 %v350, %v348
    %v415 = vpack.c.b16 %v351, %v351
    %v416 = vpack.c.b16 %v352, %v352
    %vm479 = vcmask 949248
    %v481 = vsel %vm479, %v100, 0
    %vm483 = vcmask 1041408
    %v485 = vsel %vm483, %v415, 0
    %v488 = vsel %vm483, %v416, 0
    %490 = vmatprep.subr.bf16.mxu0 %v354
    %491 = vmatpush1.bf16.msra.mxu0 %v353
    %492 = vmatprep.subr.bf16.mxu0 %v356
    %493 = vmatpush1.bf16.msra.mxu0 %v355
    %494 = vmatprep.subr.bf16.mxu0 %v358
    %495 = vmatpush1.bf16.msra.mxu0 %v357
    %496 = vmatprep.subr.bf16.mxu0 %v360
    %497 = vmatpush1.bf16.msra.mxu0 %v359
    %498 = vmatprep.subr.bf16.mxu0 %v362
    %499 = vmatpush1.bf16.msra.mxu0 %v361
    %500 = vmatprep.subr.bf16.mxu0 %v364
    %501 = vmatpush1.bf16.msra.mxu0 %v363
    %502 = vmatprep.subr.bf16.mxu0 %v366
    %503 = vmatpush1.bf16.msra.mxu0 %v365
    %504 = vmatprep.subr.bf16.mxu0 %v368
    %505 = vmatpush1.bf16.msra.mxu0 %v367
    %506 = vmatprep.subr.bf16.mxu0 %v370
    %507 = vmatpush1.bf16.msra.mxu0 %v369
    %508 = vmatprep.subr.bf16.mxu0 %v372
    %509 = vmatpush1.bf16.msra.mxu0 %v371
    %510 = vmatprep.subr.bf16.mxu0 %v374
    %511 = vmatpush1.bf16.msra.mxu0 %v373
    %512 = vmatprep.subr.bf16.mxu0 %v376
    %513 = vmatpush1.bf16.msra.mxu0 %v375
    %514 = vmatprep.subr.bf16.mxu0 %v378
    %515 = vmatpush1.bf16.msra.mxu0 %v377
    %516 = vmatprep.subr.bf16.mxu0 %v380
    %517 = vmatpush1.bf16.msra.mxu0 %v379
    %518 = vmatprep.subr.bf16.mxu0 %v382
    %519 = vmatpush1.bf16.msra.mxu0 %v381
    %520 = vmatprep.subr.bf16.mxu0 %v384
    %521 = vmatpush1.bf16.msra.mxu0 %v383
    %522 = vmatprep.mubr.bf16.mxu0 %v98
    %523 = vmatmul.mubr.bf16.gmra.mrb[0].mxu0 %v97
    %v524 = vpop.f32.mrb[0].mxu0
    %v525 = vadd.f32 0.0, %v524
    %v526 = vpop.f32.mrb[0].mxu0
    %v527 = vadd.f32 0.0, %v526
    %v528 = vpop.f32.mrb[0].mxu0
    %v529 = vpop.f32.mrb[0].mxu0
    %530 = vdwg.mxu0
    %531 = vmatprep.subr.bf16.mxu0 %v386
    %532 = vmatpush1.bf16.msra.mxu0 %v385
    %533 = vmatprep.subr.bf16.mxu0 %v388
    %534 = vmatpush1.bf16.msra.mxu0 %v387
    %535 = vmatprep.subr.bf16.mxu0 %v390
    %536 = vmatpush1.bf16.msra.mxu0 %v389
    %537 = vmatprep.subr.bf16.mxu0 %v392
    %538 = vmatpush1.bf16.msra.mxu0 %v391
    %539 = vmatprep.subr.bf16.mxu0 %v394
    %540 = vmatpush1.bf16.msra.mxu0 %v393
    %541 = vmatprep.subr.bf16.mxu0 %v396
    %542 = vmatpush1.bf16.msra.mxu0 %v395
    %543 = vmatprep.subr.bf16.mxu0 %v398
    %544 = vmatpush1.bf16.msra.mxu0 %v397
    %545 = vmatprep.subr.bf16.mxu0 %v400
    %546 = vmatpush1.bf16.msra.mxu0 %v399
    %547 = vmatprep.subr.bf16.mxu0 %v402
    %548 = vmatpush1.bf16.msra.mxu0 %v401
    %549 = vmatprep.subr.bf16.mxu0 %v404
    %550 = vmatpush1.bf16.msra.mxu0 %v403
    %551 = vmatprep.subr.bf16.mxu0 %v406
    %552 = vmatpush1.bf16.msra.mxu0 %v405
    %553 = vmatprep.subr.bf16.mxu0 %v408
    %554 = vmatpush1.bf16.msra.mxu0 %v407
    %555 = vmatprep.subr.bf16.mxu0 %v410
    %556 = vmatpush1.bf16.msra.mxu0 %v409
    %557 = vmatprep.subr.bf16.mxu0 %v412
    %558 = vmatpush1.bf16.msra.mxu0 %v411
    %559 = vmatprep.subr.bf16.mxu0 %v414
    %560 = vmatpush1.bf16.msra.mxu0 %v413
    %561 = vmatprep.subr.bf16.mxu0 %v488
    %562 = vmatpush1.bf16.msra.mxu0 %v485
    %563 = vmatprep.mubr.bf16.mxu0 %v481
    %564 = vmatmul.mubr.bf16.gmra.mrb[0].mxu0 %v99
    %v565 = vpop.f32.mrb[0].mxu0
    %v566 = vadd.f32 %v525, %v565
    %v567 = vpop.f32.mrb[0].mxu0
    %v568 = vadd.f32 %v527, %v567
    %v569 = vpop.f32.mrb[0].mxu0
    %v570 = vpop.f32.mrb[0].mxu0
    %571 = vdwg.mxu0
    %v572 = vrot.slane %v566, 4
    %v573 = vadd.f32 %v566, %v572
    %v574 = vrot.slane %v573, 2
    %v575 = vadd.f32 %v573, %v574
    %v576 = vrot.slane %v575, 1
    %v577 = vadd.f32 %v575, %v576
    %v578 = vrot.slane %v568, 4
    %v579 = vadd.f32 %v568, %v578
    %v580 = vrot.slane %v579, 2
    %v581 = vadd.f32 %v579, %v580
    %v582 = vrot.slane %v581, 1
    %v583 = vadd.f32 %v581, %v582
    %v584 = vmul.f32 %v577, 0.125
    %v585 = vmul.f32 %v583, 0.125
    %v586 = vsub.f32 %v566, %v584
    %v587 = vsub.f32 %v568, %v585
    %v588 = vmul.f32 %v586, %v586
    %v589 = vmul.f32 %v587, %v587
    %v590 = vrot.slane %v588, 4
    %v591 = vadd.f32 %v588, %v590
    %v592 = vrot.slane %v591, 2
    %v593 = vadd.f32 %v591, %v592
    %v594 = vrot.slane %v593, 1
    %v595 = vadd.f32 %v593, %v594
    %v596 = vrot.slane %v589, 4
    %v597 = vadd.f32 %v589, %v596
    %v598 = vrot.slane %v597, 2
    %v599 = vadd.f32 %v597, %v598
    %v600 = vrot.slane %v599, 1
    %v601 = vadd.f32 %v599, %v600
    %v602 = vmul.f32 %v595, 0.125
    %v603 = vmul.f32 %v601, 0.125
    %v604 = vadd.f32 %v602, 1e-05
    %v605 = vadd.f32 %v603, 1e-05
    %v606 = vrsqrt.pop %v604
    %v607 = vrsqrt.pop %v605
    %v610 = vcombine.low %v606, %v607
    %v612 = vunpack.c.l.s4 1966171168
    %v613 = vunpack.c.0.s8 %v612
    %v614 = vlaneseq
    %v615 = vshrl.u32 %v614, 7
    %v616 = vsub.s32 %v613, %v615
    %v617 = vrot.slane %v610, %v616
    %v619 = vunpack.c.l.s4 1966171168
    %v620 = vunpack.c.0.s8 %v619
    %v621 = vlaneseq
    %v622 = vshrl.u32 %v621, 7
    %v623 = vsub.s32 %v620, %v622
    %v624 = vrot.slane %v617, %v623
    %v626 = vmul.f32 %v85, %v624
    %v628 = vlaneseq
    %v629 = vshrl.u32 %v628, 7
    %v630 = vsub.s32 0, %v629
    %v631 = vrot.slane %v626, %v630
    %v632 = vlaneseq
    %v633 = vshrl.u32 %v632, 7
    %v634 = vsub.s32 1, %v633
    %v635 = vrot.slane %v626, %v634
    %v638 = vmul.f32 %v586, %v631
    %v639 = vmul.f32 %v587, %v635
    %v641 = vlaneseq
    %v642 = vshrl.u32 %v641, 7
    %v643 = vsub.s32 0, %v642
    %v644 = vrot.slane %v87, %v643
    %v645 = vlaneseq
    %v646 = vshrl.u32 %v645, 7
    %v647 = vsub.s32 1, %v646
    %v648 = vrot.slane %v87, %v647
    %v651 = vadd.f32 %v638, %v644
    %v652 = vadd.f32 %v639, %v648
    %v653 = vmul.f32 %v651, 0.01
    %v654 = vmul.f32 %v652, 0.01
    %v655 = vmax.f32 %v651, %v653
    %v656 = vmax.f32 %v652, %v654
    %v657 = vpack.c.bf16 %v655, %v655
    %v658 = vpack.c.bf16 %v656, %v656
    %v659 = vld [vmem:[#allocation6] sm:$0xff]
    %v660 = vld [vmem:[#allocation6 + $0x8] sm:$0xff]
    %v661 = vld [vmem:[#allocation6 + $0x10] sm:$0xff]
    %v662 = vld [vmem:[#allocation6 + $0x18] sm:$0xff]
    %v663 = vld [vmem:[#allocation6 + $0x20] sm:$0xff]
    %v664 = vld [vmem:[#allocation6 + $0x28] sm:$0xff]
    %v665 = vld [vmem:[#allocation6 + $0x30] sm:$0xff]
    %v666 = vld [vmem:[#allocation6 + $0x38] sm:$0xff]
    %v667 = vld [vmem:[#allocation6 + $0x40] sm:$0xff]
    %v668 = vld [vmem:[#allocation6 + $0x48] sm:$0xff]
    %v669 = vld [vmem:[#allocation6 + $0x50] sm:$0xff]
    %v670 = vld [vmem:[#allocation6 + $0x58] sm:$0xff]
    %v671 = vld [vmem:[#allocation6 + $0x60] sm:$0xff]
    %v672 = vld [vmem:[#allocation6 + $0x68] sm:$0xff]
    %v673 = vld [vmem:[#allocation6 + $0x70] sm:$0xff]
    %v674 = vld [vmem:[#allocation6 + $0x78] sm:$0xff]
    %v675 = vld [vmem:[#allocation6 + $0x80] sm:$0xff]
    %v676 = vld [vmem:[#allocation6 + $0x88] sm:$0xff]
    %v677 = vld [vmem:[#allocation6 + $0x90] sm:$0xff]
    %v678 = vld [vmem:[#allocation6 + $0x98] sm:$0xff]
    %v679 = vld [vmem:[#allocation6 + $0xa0] sm:$0xff]
    %v680 = vld [vmem:[#allocation6 + $0xa8] sm:$0xff]
    %v681 = vld [vmem:[#allocation6 + $0xb0] sm:$0xff]
    %v682 = vld [vmem:[#allocation6 + $0xb8] sm:$0xff]
    %v683 = vld [vmem:[#allocation6 + $0xc0] sm:$0xff]
    %v684 = vld [vmem:[#allocation6 + $0xc8] sm:$0xff]
    %v685 = vld [vmem:[#allocation6 + $0xd0] sm:$0xff]
    %v686 = vld [vmem:[#allocation6 + $0xd8] sm:$0xff]
    %v687 = vld [vmem:[#allocation6 + $0xe0] sm:$0xff]
    %v688 = vld [vmem:[#allocation6 + $0xe8] sm:$0xff]
    %v689 = vld [vmem:[#allocation6 + $0xf0] sm:$0xff]
    %v690 = vld [vmem:[#allocation6 + $0xf8] sm:$0xff]
    %v723 = vunpack.c.l.b16 %v659
    %v724 = vunpack.c.h.b16 %v659
    %v725 = vunpack.c.l.b16 %v660
    %v726 = vunpack.c.h.b16 %v660
    %v727 = vunpack.c.l.b16 %v661
    %v728 = vunpack.c.h.b16 %v661
    %v729 = vunpack.c.l.b16 %v662
    %v730 = vunpack.c.h.b16 %v662
    %v731 = vunpack.c.l.b16 %v663
    %v732 = vunpack.c.h.b16 %v663
    %v733 = vunpack.c.l.b16 %v664
    %v734 = vunpack.c.h.b16 %v664
    %v735 = vunpack.c.l.b16 %v665
    %v736 = vunpack.c.h.b16 %v665
    %v737 = vunpack.c.l.b16 %v666
    %v738 = vunpack.c.h.b16 %v666
    %v739 = vunpack.c.l.b16 %v667
    %v740 = vunpack.c.h.b16 %v667
    %v741 = vunpack.c.l.b16 %v668
    %v742 = vunpack.c.h.b16 %v668
    %v743 = vunpack.c.l.b16 %v669
    %v744 = vunpack.c.h.b16 %v669
    %v745 = vunpack.c.l.b16 %v670
    %v746 = vunpack.c.h.b16 %v670
    %v747 = vunpack.c.l.b16 %v671
    %v748 = vunpack.c.h.b16 %v671
    %v749 = vunpack.c.l.b16 %v672
    %v750 = vunpack.c.h.b16 %v672
    %v751 = vunpack.c.l.b16 %v673
    %v752 = vunpack.c.h.b16 %v673
    %v753 = vunpack.c.l.b16 %v674
    %v754 = vunpack.c.h.b16 %v674
    %v755 = vunpack.c.l.b16 %v675
    %v756 = vunpack.c.h.b16 %v675
    %v757 = vunpack.c.l.b16 %v676
    %v758 = vunpack.c.h.b16 %v676
    %v759 = vunpack.c.l.b16 %v677
    %v760 = vunpack.c.h.b16 %v677
    %v761 = vunpack.c.l.b16 %v678
    %v762 = vunpack.c.h.b16 %v678
    %v763 = vunpack.c.l.b16 %v679
    %v764 = vunpack.c.h.b16 %v679
    %v765 = vunpack.c.l.b16 %v680
    %v766 = vunpack.c.h.b16 %v680
    %v767 = vunpack.c.l.b16 %v681
    %v768 = vunpack.c.h.b16 %v681
    %v769 = vunpack.c.l.b16 %v682
    %v770 = vunpack.c.h.b16 %v682
    %v771 = vunpack.c.l.b16 %v683
    %v772 = vunpack.c.h.b16 %v683
    %v773 = vunpack.c.l.b16 %v684
    %v774 = vunpack.c.h.b16 %v684
    %v775 = vunpack.c.l.b16 %v685
    %v776 = vunpack.c.h.b16 %v685
    %v777 = vunpack.c.l.b16 %v686
    %v778 = vunpack.c.h.b16 %v686
    %v779 = vunpack.c.l.b16 %v687
    %v780 = vunpack.c.h.b16 %v687
    %v781 = vunpack.c.l.b16 %v688
    %v782 = vunpack.c.h.b16 %v688
    %v783 = vunpack.c.l.b16 %v689
    %v784 = vunpack.c.h.b16 %v689
    %v785 = vunpack.c.l.b16 %v690
    %v786 = vunpack.c.h.b16 %v690
    %v787 = vpack.c.b16 %v725, %v723
    %v788 = vpack.c.b16 %v726, %v724
    %v789 = vpack.c.b16 %v729, %v727
    %v790 = vpack.c.b16 %v730, %v728
    %v791 = vpack.c.b16 %v733, %v731
    %v792 = vpack.c.b16 %v734, %v732
    %v793 = vpack.c.b16 %v737, %v735
    %v794 = vpack.c.b16 %v738, %v736
    %v795 = vpack.c.b16 %v741, %v739
    %v796 = vpack.c.b16 %v742, %v740
    %v797 = vpack.c.b16 %v745, %v743
    %v798 = vpack.c.b16 %v746, %v744
    %v799 = vpack.c.b16 %v749, %v747
    %v800 = vpack.c.b16 %v750, %v748
    %v801 = vpack.c.b16 %v753, %v751
    %v802 = vpack.c.b16 %v754, %v752
    %v803 = vpack.c.b16 %v757, %v755
    %v804 = vpack.c.b16 %v758, %v756
    %v805 = vpack.c.b16 %v761, %v759
    %v806 = vpack.c.b16 %v762, %v760
    %v807 = vpack.c.b16 %v765, %v763
    %v808 = vpack.c.b16 %v766, %v764
    %v809 = vpack.c.b16 %v769, %v767
    %v810 = vpack.c.b16 %v770, %v768
    %v811 = vpack.c.b16 %v773, %v771
    %v812 = vpack.c.b16 %v774, %v772
    %v813 = vpack.c.b16 %v777, %v775
    %v814 = vpack.c.b16 %v778, %v776
    %v815 = vpack.c.b16 %v781, %v779
    %v816 = vpack.c.b16 %v782, %v780
    %v817 = vpack.c.b16 %v785, %v783
    %v818 = vpack.c.b16 %v786, %v784
    %851 = vmatprep.subr.bf16.mxu0 %v788
    %852 = vmatpush1.bf16.msra.mxu0 %v787
    %853 = vmatprep.subr.bf16.mxu0 %v790
    %854 = vmatpush1.bf16.msra.mxu0 %v789
    %855 = vmatprep.subr.bf16.mxu0 %v792
    %856 = vmatpush1.bf16.msra.mxu0 %v791
    %857 = vmatprep.subr.bf16.mxu0 %v794
    %858 = vmatpush1.bf16.msra.mxu0 %v793
    %859 = vmatprep.subr.bf16.mxu0 %v796
    %860 = vmatpush1.bf16.msra.mxu0 %v795
    %861 = vmatprep.subr.bf16.mxu0 %v798
    %862 = vmatpush1.bf16.msra.mxu0 %v797
    %863 = vmatprep.subr.bf16.mxu0 %v800
    %864 = vmatpush1.bf16.msra.mxu0 %v799
    %865 = vmatprep.subr.bf16.mxu0 %v802
    %866 = vmatpush1.bf16.msra.mxu0 %v801
    %867 = vmatprep.subr.bf16.mxu0 %v804
    %868 = vmatpush1.bf16.msra.mxu0 %v803
    %869 = vmatprep.subr.bf16.mxu0 %v806
    %870 = vmatpush1.bf16.msra.mxu0 %v805
    %871 = vmatprep.subr.bf16.mxu0 %v808
    %872 = vmatpush1.bf16.msra.mxu0 %v807
    %873 = vmatprep.subr.bf16.mxu0 %v810
    %874 = vmatpush1.bf16.msra.mxu0 %v809
    %875 = vmatprep.subr.bf16.mxu0 %v812
    %876 = vmatpush1.bf16.msra.mxu0 %v811
    %877 = vmatprep.subr.bf16.mxu0 %v814
    %878 = vmatpush1.bf16.msra.mxu0 %v813
    %879 = vmatprep.subr.bf16.mxu0 %v816
    %880 = vmatpush1.bf16.msra.mxu0 %v815
    %881 = vmatprep.subr.bf16.mxu0 %v818
    %882 = vmatpush1.bf16.msra.mxu0 %v817
    %883 = vmatprep.mubr.bf16.mxu0 %v658
    %884 = vmatmul.mubr.bf16.gmra.mrb[0].mxu0 %v657
    %v885 = vpop.f32.mrb[0].mxu0
    %v886 = vadd.f32 0.0, %v885
    %v887 = vpop.f32.mrb[0].mxu0
    %v888 = vadd.f32 0.0, %v887
    %v889 = vpop.f32.mrb[0].mxu0
    %v890 = vpop.f32.mrb[0].mxu0
    %891 = vdwg.mxu0
    %v892 = vrot.slane %v886, 4
    %v893 = vadd.f32 %v886, %v892
    %v894 = vrot.slane %v893, 2
    %v895 = vadd.f32 %v893, %v894
    %v896 = vrot.slane %v895, 1
    %v897 = vadd.f32 %v895, %v896
    %v898 = vrot.slane %v888, 4
    %v899 = vadd.f32 %v888, %v898
    %v900 = vrot.slane %v899, 2
    %v901 = vadd.f32 %v899, %v900
    %v902 = vrot.slane %v901, 1
    %v903 = vadd.f32 %v901, %v902
    %v904 = vmul.f32 %v897, 0.125
    %v905 = vmul.f32 %v903, 0.125
    %v906 = vsub.f32 %v886, %v904
    %v907 = vsub.f32 %v888, %v905
    %v908 = vmul.f32 %v906, %v906
    %v909 = vmul.f32 %v907, %v907
    %v910 = vrot.slane %v908, 4
    %v911 = vadd.f32 %v908, %v910
    %v912 = vrot.slane %v911, 2
    %v913 = vadd.f32 %v911, %v912
    %v914 = vrot.slane %v913, 1
    %v915 = vadd.f32 %v913, %v914
    %v916 = vrot.slane %v909, 4
    %v917 = vadd.f32 %v909, %v916
    %v918 = vrot.slane %v917, 2
    %v919 = vadd.f32 %v917, %v918
    %v920 = vrot.slane %v919, 1
    %v921 = vadd.f32 %v919, %v920
    %v922 = vmul.f32 %v915, 0.125
    %v923 = vmul.f32 %v921, 0.125
    %v924 = vadd.f32 %v922, 1e-05
    %v925 = vadd.f32 %v923, 1e-05
    %v926 = vrsqrt.pop %v924
    %v927 = vrsqrt.pop %v925
    %v930 = vcombine.low %v926, %v927
    %v932 = vunpack.c.l.s4 1966171168
    %v933 = vunpack.c.0.s8 %v932
    %v934 = vlaneseq
    %v935 = vshrl.u32 %v934, 7
    %v936 = vsub.s32 %v933, %v935
    %v937 = vrot.slane %v930, %v936
    %v939 = vunpack.c.l.s4 1966171168
    %v940 = vunpack.c.0.s8 %v939
    %v941 = vlaneseq
    %v942 = vshrl.u32 %v941, 7
    %v943 = vsub.s32 %v940, %v942
    %v944 = vrot.slane %v937, %v943
    %v946 = vmul.f32 %v89, %v944
    %v948 = vlaneseq
    %v949 = vshrl.u32 %v948, 7
    %v950 = vsub.s32 0, %v949
    %v951 = vrot.slane %v946, %v950
    %v952 = vlaneseq
    %v953 = vshrl.u32 %v952, 7
    %v954 = vsub.s32 1, %v953
    %v955 = vrot.slane %v946, %v954
    %v958 = vmul.f32 %v906, %v951
    %v959 = vmul.f32 %v907, %v955
    %v961 = vlaneseq
    %v962 = vshrl.u32 %v961, 7
    %v963 = vsub.s32 0, %v962
    %v964 = vrot.slane %v91, %v963
    %v965 = vlaneseq
    %v966 = vshrl.u32 %v965, 7
    %v967 = vsub.s32 1, %v966
    %v968 = vrot.slane %v91, %v967
    %v971 = vadd.f32 %v958, %v964
    %v972 = vadd.f32 %v959, %v968
    %v973 = vmul.f32 %v971, 0.01
    %v974 = vmul.f32 %v972, 0.01
    %v975 = vmax.f32 %v971, %v973
    %v976 = vmax.f32 %v972, %v974
    %v977 = vpack.c.bf16 %v975, %v975
    %v978 = vpack.c.bf16 %v976, %v976
    %v979 = vld [vmem:[#allocation7] sm:$0xf]
    %v980 = vld [vmem:[#allocation7 + $0x4] sm:$0xf]
    %v981 = vld [vmem:[#allocation7 + $0x8] sm:$0xf]
    %v982 = vld [vmem:[#allocation7 + $0xc] sm:$0xf]
    %v983 = vld [vmem:[#allocation7 + $0x10] sm:$0xf]
    %v984 = vld [vmem:[#allocation7 + $0x14] sm:$0xf]
    %v985 = vld [vmem:[#allocation7 + $0x18] sm:$0xf]
    %v986 = vld [vmem:[#allocation7 + $0x1c] sm:$0xf]
    %v987 = vld [vmem:[#allocation7 + $0x20] sm:$0xf]
    %v988 = vld [vmem:[#allocation7 + $0x24] sm:$0xf]
    %v989 = vld [vmem:[#allocation7 + $0x28] sm:$0xf]
    %v990 = vld [vmem:[#allocation7 + $0x2c] sm:$0xf]
    %v991 = vld [vmem:[#allocation7 + $0x30] sm:$0xf]
    %v992 = vld [vmem:[#allocation7 + $0x34] sm:$0xf]
    %v993 = vld [vmem:[#allocation7 + $0x38] sm:$0xf]
    %v994 = vld [vmem:[#allocation7 + $0x3c] sm:$0xf]
    %v995 = vld [vmem:[#allocation7 + $0x40] sm:$0xf]
    %v996 = vld [vmem:[#allocation7 + $0x44] sm:$0xf]
    %v997 = vld [vmem:[#allocation7 + $0x48] sm:$0xf]
    %v998 = vld [vmem:[#allocation7 + $0x4c] sm:$0xf]
    %v999 = vld [vmem:[#allocation7 + $0x50] sm:$0xf]
    %v1000 = vld [vmem:[#allocation7 + $0x54] sm:$0xf]
    %v1001 = vld [vmem:[#allocation7 + $0x58] sm:$0xf]
    %v1002 = vld [vmem:[#allocation7 + $0x5c] sm:$0xf]
    %v1003 = vld [vmem:[#allocation7 + $0x60] sm:$0xf]
    %v1004 = vld [vmem:[#allocation7 + $0x64] sm:$0xf]
    %v1005 = vld [vmem:[#allocation7 + $0x68] sm:$0xf]
    %v1006 = vld [vmem:[#allocation7 + $0x6c] sm:$0xf]
    %v1007 = vld [vmem:[#allocation7 + $0x70] sm:$0xf]
    %v1008 = vld [vmem:[#allocation7 + $0x74] sm:$0xf]
    %v1009 = vld [vmem:[#allocation7 + $0x78] sm:$0xf]
    %v1010 = vld [vmem:[#allocation7 + $0x7c] sm:$0xf]
    %v1043 = vunpack.c.l.b16 %v979
    %v1044 = vunpack.c.l.b16 %v980
    %v1045 = vunpack.c.l.b16 %v981
    %v1046 = vunpack.c.l.b16 %v982
    %v1047 = vunpack.c.l.b16 %v983
    %v1048 = vunpack.c.l.b16 %v984
    %v1049 = vunpack.c.l.b16 %v985
    %v1050 = vunpack.c.l.b16 %v986
    %v1051 = vunpack.c.l.b16 %v987
    %v1052 = vunpack.c.l.b16 %v988
    %v1053 = vunpack.c.l.b16 %v989
    %v1054 = vunpack.c.l.b16 %v990
    %v1055 = vunpack.c.l.b16 %v991
    %v1056 = vunpack.c.l.b16 %v992
    %v1057 = vunpack.c.l.b16 %v993
    %v1058 = vunpack.c.l.b16 %v994
    %v1059 = vunpack.c.l.b16 %v995
    %v1060 = vunpack.c.l.b16 %v996
    %v1061 = vunpack.c.l.b16 %v997
    %v1062 = vunpack.c.l.b16 %v998
    %v1063 = vunpack.c.l.b16 %v999
    %v1064 = vunpack.c.l.b16 %v1000
    %v1065 = vunpack.c.l.b16 %v1001
    %v1066 = vunpack.c.l.b16 %v1002
    %v1067 = vunpack.c.l.b16 %v1003
    %v1068 = vunpack.c.l.b16 %v1004
    %v1069 = vunpack.c.l.b16 %v1005
    %v1070 = vunpack.c.l.b16 %v1006
    %v1071 = vunpack.c.l.b16 %v1007
    %v1072 = vunpack.c.l.b16 %v1008
    %v1073 = vunpack.c.l.b16 %v1009
    %v1074 = vunpack.c.l.b16 %v1010
    %v1075 = vpack.c.b16 %v1044, %v1043
    %v1076 = vpack.c.b16 %v1046, %v1045
    %v1077 = vpack.c.b16 %v1048, %v1047
    %v1078 = vpack.c.b16 %v1050, %v1049
    %v1079 = vpack.c.b16 %v1052, %v1051
    %v1080 = vpack.c.b16 %v1054, %v1053
    %v1081 = vpack.c.b16 %v1056, %v1055
    %v1082 = vpack.c.b16 %v1058, %v1057
    %v1083 = vpack.c.b16 %v1060, %v1059
    %v1084 = vpack.c.b16 %v1062, %v1061
    %v1085 = vpack.c.b16 %v1064, %v1063
    %v1086 = vpack.c.b16 %v1066, %v1065
    %v1087 = vpack.c.b16 %v1068, %v1067
    %v1088 = vpack.c.b16 %v1070, %v1069
    %v1089 = vpack.c.b16 %v1072, %v1071
    %v1090 = vpack.c.b16 %v1074, %v1073
    %1107 = vmatprep.subr.bf16.mxu0 0
    %1108 = vmatpush1.bf16.msra.mxu0 %v1075
    %1109 = vmatprep.subr.bf16.mxu0 0
    %1110 = vmatpush1.bf16.msra.mxu0 %v1076
    %1111 = vmatprep.subr.bf16.mxu0 0
    %1112 = vmatpush1.bf16.msra.mxu0 %v1077
    %1113 = vmatprep.subr.bf16.mxu0 0
    %1114 = vmatpush1.bf16.msra.mxu0 %v1078
    %1115 = vmatprep.subr.bf16.mxu0 0
    %1116 = vmatpush1.bf16.msra.mxu0 %v1079
    %1117 = vmatprep.subr.bf16.mxu0 0
    %1118 = vmatpush1.bf16.msra.mxu0 %v1080
    %1119 = vmatprep.subr.bf16.mxu0 0
    %1120 = vmatpush1.bf16.msra.mxu0 %v1081
    %1121 = vmatprep.subr.bf16.mxu0 0
    %1122 = vmatpush1.bf16.msra.mxu0 %v1082
    %1123 = vmatprep.subr.bf16.mxu0 0
    %1124 = vmatpush1.bf16.msra.mxu0 %v1083
    %1125 = vmatprep.subr.bf16.mxu0 0
    %1126 = vmatpush1.bf16.msra.mxu0 %v1084
    %1127 = vmatprep.subr.bf16.mxu0 0
    %1128 = vmatpush1.bf16.msra.mxu0 %v1085
    %1129 = vmatprep.subr.bf16.mxu0 0
    %1130 = vmatpush1.bf16.msra.mxu0 %v1086
    %1131 = vmatprep.subr.bf16.mxu0 0
    %1132 = vmatpush1.bf16.msra.mxu0 %v1087
    %1133 = vmatprep.subr.bf16.mxu0 0
    %1134 = vmatpush1.bf16.msra.mxu0 %v1088
    %1135 = vmatprep.subr.bf16.mxu0 0
    %1136 = vmatpush1.bf16.msra.mxu0 %v1089
    %1137 = vmatprep.subr.bf16.mxu0 0
    %1138 = vmatpush1.bf16.msra.mxu0 %v1090
    %1139 = vmatprep.mubr.bf16.mxu0 %v978
    %1140 = vmatmul.mubr.bf16.gmra.mrb[0].mxu0 %v977
    %v1141 = vpop.f32.mrb[0].mxu0
    %v1142 = vadd.f32 %v92, %v1141
    %v1143 = vpop.f32.mrb[0].mxu0
    %v1144 = vpop.f32.mrb[0].mxu0
    %v1145 = vpop.f32.mrb[0].mxu0
    %1146 = vdwg.mxu0
    %vm1147 = vcmask 15360
    %1148 = vst.msk [vmem:[%s5] sm:$0xff] %vm1147, %v1142
    // Predicated region
    $region42: #{tpu_custom_call.1} parent=1 // pred_check
      _
    $region43: #{tpu_custom_call.1} parent=1 // pred_check_branch
      %1150 = sbr.rel (0) target = $region45
    $region44: #{tpu_custom_call.1} parent=1 // pred_region
      _
    $region45: #{tpu_custom_call.1} parent=1 // pred_fallthru
      _
    // Predicated region
    $region46: #{tpu_custom_call.1} parent=1 // pred_check
      _
    $region47: #{tpu_custom_call.1} parent=1 // pred_check_branch
      %1152 = sbr.rel (0) target = $region49
    $region48: #{tpu_custom_call.1} parent=1 // pred_region
      _
    $region49: #{tpu_custom_call.1} parent=1 // pred_fallthru
      _
    %1153 = vsyncpa [#allocation3], 1
    %1154 = vsyncpa [#allocation5], 1
    %1155 = vsyncpa [#allocation8], 1

</llo_original>
